<compile_context>
chip_gen: v6e
topology: v6e:2x2x1
jax: 0.10.0
libtpu: 0.0.40
codegen_flags: <defaults>
</compile_context>

<pallas_src>
import functools
import math

import jax
import jax.numpy as jnp
import numpy as np
from jax.experimental import pallas as pl
from jax.experimental.pallas import tpu as pltpu


# ----------------------------------------------------------------------------
# Pallas kernel: depthwise 3x3 conv (stride 1, pad 1) + bias, lane-packed W*C
# ----------------------------------------------------------------------------
def _dwconv3x3_packed_kernel(x_ref, halo_ref, w_ref, b_ref, o_ref, *, C):
    # x_ref:    (1, T, WC)     centre rows of this H-tile
    # halo_ref: (1, 1, 2, WC)  row above / row below the tile (zeros at edges)
    # w_ref:    (9, WC)        lane-replicated per-tap depthwise weights (f32)
    #                          with the w==0 / w==W-1 edge masks folded in
    # b_ref:    (1, WC)        lane-replicated bias (f32)
    # o_ref:    (1, T, WC)
    x = x_ref[0]
    halo = halo_ref[0, 0]
    w = w_ref[...]
    bias = b_ref[...]

    T = x.shape[0]
    # rows h-1 .. h+T of the (zero-padded) image for this tile, cast once
    xc = jnp.concatenate([halo[0:1], x, halo[1:2]], axis=0).astype(jnp.float32)
    WC = xc.shape[1]
    # w-1 / w+1 neighbours: lane rolls by +/-C; the wrapped-in edge columns are
    # killed by the zeroed edge lanes in the packed weights (no in-kernel mask).
    xl = pltpu.roll(xc, C, axis=1)        # left  neighbour (w-1)
    xr = pltpu.roll(xc, WC - C, axis=1)   # right neighbour (w+1)
    taps = (xl, xc, xr)                   # kw = 0, 1, 2

    # init from centre tap + bias (residual already folded into w[4])
    acc = xc[1:1 + T] * w[4:5] + bias
    for kh in range(3):                   # static 3x3 unroll, 8 more MACs
        for kw in range(3):
            k = 3 * kh + kw
            if k == 4:
                continue
            acc = acc + taps[kw][kh:kh + T] * w[k:k + 1]

    o_ref[0] = acc.astype(o_ref.dtype)    # lane-dense, unmasked store


# ----------------------------------------------------------------------------
# Tiling helpers
# ----------------------------------------------------------------------------
def _sublane_pack(itemsize):
    # 8 for f32, 16 for bf16/f16, 32 for int8/fp8
    return max(8, 8 * (4 // max(1, itemsize)))


def _select_tile_h(H, WC, itemsize, pack, B):
    divs = [t for t in range(pack, H + 1, pack) if H % t == 0]
    if H not in divs:
        divs.append(H)                    # a single full-H tile is always legal
    # full-H working set: double-buffered in+out blocks + ~5 f32 temporaries
    full_bytes = 4 * H * WC * itemsize + 5 * (H + 2) * WC * 4
    if full_bytes <= 24 * 2**20:
        tile_h = H                        # no halos at all
    else:
        block_budget = 2 << 20            # ~2 MiB per input block
        fits = [t for t in divs if t * WC * itemsize <= block_budget]
        tile_h = max(fits) if fits else min(divs)
    if B == 1 and tile_h == H:            # keep both v7x TensorCores busy
        smaller = [t for t in divs if t < H]
        if smaller:
            tile_h = max(smaller)
    return tile_h


# ----------------------------------------------------------------------------
# Wrapper: W padding, tiling, halo rows, weight/bias packing, pallas_call
# ----------------------------------------------------------------------------
def dwconv3x3_packed(x_img, w_hwc, bias, *, residual, tile_h=None):
    """Depthwise 3x3 conv, stride 1, pad 1, + bias (+ residual).

    x_img: (B, H, W, C); w_hwc: (3, 3, C); bias: (C,).  Returns (B, H, W, C).
    """
    B, H, W, C = x_img.shape
    dt = x_img.dtype
    itemsize = jnp.dtype(dt).itemsize
    pack = _sublane_pack(itemsize)

    # pad W so the packed lane width W*C is a multiple of 128 (lane-dense
    # loads/stores); pad columns are zero so they are inert for the zero-padded
    # conv, and the padded outputs are sliced off below.
    lane_step = 128 // math.gcd(C, 128)
    W_pad = ((W + lane_step - 1) // lane_step) * lane_step
    if W_pad != W:
        x_img = jnp.pad(x_img, ((0, 0), (0, 0), (0, W_pad - W), (0, 0)))
    WC = W_pad * C

    packed = x_img.reshape(B, H, WC)            # lane-pack W into the lane dim

    if tile_h is None:
        tile_h = _select_tile_h(H, WC, itemsize, pack, B)
    if H % tile_h != 0 or (tile_h != H and tile_h % pack != 0):
        tile_h = H                              # fall back: one full-H tile
    nht = H // tile_h

    # per-tile halo rows (zeros at the image boundary), merged into ONE array:
    # halo[:, t, 0] = row t*tile_h - 1, halo[:, t, 1] = row (t+1)*tile_h
    zrow = jnp.zeros((B, 1, WC), dt)
    if nht > 1:
        tops = packed[:, tile_h - 1:H - 1:tile_h, :]
        bots = packed[:, tile_h:H:tile_h, :]
        top_halo = jnp.concatenate([zrow, tops], axis=1)
        bot_halo = jnp.concatenate([bots, zrow], axis=1)
    else:
        top_halo = zrow
        bot_halo = zrow
    halo = jnp.stack([top_halo, bot_halo], axis=2)       # (B, nht, 2, WC)

    # lane-replicated per-tap weights (f32): residual folded into the centre
    # tap, image-edge zero padding along W folded into the kw=0 / kw=2 rows.
    w9 = w_hwc.reshape(9, C).astype(jnp.float32)
    if residual:
        w9 = w9.at[4].add(1.0)
    col = jnp.arange(WC, dtype=jnp.int32) // C            # column index per lane
    left = (col != 0).astype(jnp.float32)                 # kills the w==0 left tap
    right = (col != W_pad - 1).astype(jnp.float32)        # kills last-col right tap
    ones = jnp.ones_like(left)
    mask9 = jnp.stack([left, ones, right] * 3, axis=0)    # (9, WC); kw = k % 3
    w_packed = jnp.tile(w9, (1, W_pad)) * mask9
    b_packed = jnp.tile(bias.astype(jnp.float32), W_pad).reshape(1, WC)

    # VMEM budget: double-buffered in/out blocks + in-kernel f32 temporaries
    # (xc/xl/xr/acc) with headroom; clamp to [16, 48] MiB (v7x has 64 MiB).
    blk_bytes = tile_h * WC * itemsize
    f32_blk = (tile_h + 2) * WC * 4
    vmem_bytes = int(min(48 * 2**20, max(16 * 2**20, 8 * blk_bytes + 8 * f32_blk)))

    kernel = functools.partial(_dwconv3x3_packed_kernel, C=C)
    out = pl.pallas_call(
        kernel,
        out_shape=jax.ShapeDtypeStruct((B, H, WC), dt),
        grid_spec=pltpu.PrefetchScalarGridSpec(
            num_scalar_prefetch=0,
            grid=(B, nht),
            in_specs=[
                pl.BlockSpec((1, tile_h, WC), lambda b, t: (b, t, 0)),
                pl.BlockSpec((1, 1, 2, WC), lambda b, t: (b, t, 0, 0)),
                pl.BlockSpec((9, WC), lambda b, t: (0, 0)),
                pl.BlockSpec((1, WC), lambda b, t: (0, 0)),
            ],
            out_specs=pl.BlockSpec((1, tile_h, WC), lambda b, t: (b, t, 0)),
        ),
        compiler_params=pltpu.CompilerParams(
            dimension_semantics=("parallel", "parallel"),
            vmem_limit_bytes=vmem_bytes,
        ),
    )(packed, halo, w_packed, b_packed)

    out = out.reshape(B, H, W_pad, C)
    if W_pad != W:
        out = out[:, :, :W, :]
    return out


# ----------------------------------------------------------------------------
# PosCNN forward (matches the PyTorch module, s=1)
# ----------------------------------------------------------------------------
def pos_cnn_forward(x, H, W, weight_oihw, bias, q_to_ab=None, tile_h=None):
    """x: (B, N, C).  weight_oihw: (C, 1, 3, 3) (torch depthwise), bias: (C,)."""
    B, N, C = x.shape
    w_hwc = jnp.transpose(weight_oihw[:, 0, :, :], (1, 2, 0))   # (3, 3, C)

    if q_to_ab is not None:
        # scatter tokens onto the (H, W) grid, conv, gather back, add (glue).
        # TODO(synk): if this path is hot, fuse the gather-back into the kernel
        # via scalar-prefetched row indices instead of the XLA scatter/gather.
        # NOTE: duplicate / OOB (row, col) bins follow XLA scatter semantics,
        # mirroring the unspecified ordering of the PyTorch indexed assignment.
        ab = jnp.asarray(q_to_ab, jnp.float32)
        new_ab = jnp.floor((ab + 110.0) / 10.0).astype(jnp.int32)
        rows, cols = new_ab[:, 0], new_ab[:, 1]
        cnn_feat = jnp.zeros((B, H, W, C), x.dtype).at[:, rows, cols, :].set(x)
        conv = dwconv3x3_packed(cnn_feat, w_hwc, bias, residual=False,
                                tile_h=tile_h)
        x_pos = conv[:, rows, cols, :]
        return x + x_pos
    else:
        # PyTorch: x (B,N,C) -> transpose -> view (B,C,H,W); channels-last this
        # is just a reshape (B, N, C) -> (B, H, W, C) since N = h*W + w.
        cnn_feat = x.reshape(B, H, W, C)
        out = dwconv3x3_packed(cnn_feat, w_hwc, bias, residual=True,
                               tile_h=tile_h)
        return out.reshape(B, N, C)


# ----------------------------------------------------------------------------
# Pure-JAX references (lax conv)
# ----------------------------------------------------------------------------
def ref_forward(x, H, W, weight_oihw, bias):
    B, N, C = x.shape
    cnn = jnp.transpose(x, (0, 2, 1)).reshape(B, C, H, W)
    out = jax.lax.conv_general_dilated(
        cnn, weight_oihw, window_strides=(1, 1), padding=((1, 1), (1, 1)),
        dimension_numbers=("NCHW", "OIHW", "NCHW"), feature_group_count=C)
    out = out + bias[None, :, None, None] + cnn
    return out.reshape(B, C, N).transpose(0, 2, 1)


def ref_forward_qab(x, H, W, weight_oihw, bias, q_to_ab):
    B, N, C = x.shape
    ab = jnp.asarray(q_to_ab, jnp.float32)
    new_ab = jnp.floor((ab + 110.0) / 10.0).astype(jnp.int32)
    rows, cols = new_ab[:, 0], new_ab[:, 1]
    cnn_feat = jnp.zeros((B, H, W, C), x.dtype).at[:, rows, cols, :].set(x)
    nchw = jnp.transpose(cnn_feat, (0, 3, 1, 2))
    out = jax.lax.conv_general_dilated(
        nchw, weight_oihw, window_strides=(1, 1), padding=((1, 1), (1, 1)),
        dimension_numbers=("NCHW", "OIHW", "NCHW"), feature_group_count=C)
    out = out + bias[None, :, None, None]
    out_hwc = jnp.transpose(out, (0, 2, 3, 1))
    return x + out_hwc[:, rows, cols, :]


if __name__ == "__main__":
    # PosCNN(in_chans=embed_dim=32, s=1); small deterministic test shapes.
    B, H, W = 2, 16, 8
    C = 32                      # in_chans == embed_dim (depthwise conv)
    N = H * W                   # W*C = 256 lanes (multiple of 128)

    key = jax.random.PRNGKey(0)
    kx, kw_key, kb = jax.random.split(key, 3)
    x = jax.random.normal(kx, (B, N, C), jnp.float32)
    # Conv2d(C, C, 3, 1, 1, groups=C) weight: (C, 1, 3, 3), bias: (C,)
    weight = jax.random.normal(kw_key, (C, 1, 3, 3), jnp.float32) * 0.1
    bias = jax.random.normal(kb, (C,), jnp.float32) * 0.1

    ref = ref_forward(x, H, W, weight, bias)

    # main path, explicit tile_h=8 -> grid=(B, 2): exercises the halo path
    out = jax.block_until_ready(
        pos_cnn_forward(x, H, W, weight, bias, q_to_ab=None, tile_h=8))
    np.testing.assert_allclose(np.asarray(out), np.asarray(ref),
                               rtol=1e-5, atol=1e-5)

    # main path, auto tile selection -> single full-H tile, no halos
    out_auto = jax.block_until_ready(
        pos_cnn_forward(x, H, W, weight, bias, q_to_ab=None))
    np.testing.assert_allclose(np.asarray(out_auto), np.asarray(ref),
                               rtol=1e-5, atol=1e-5)

    # bf16 input path (f32 accumulation, bf16 store) — loose tolerance
    out_bf = jax.block_until_ready(
        pos_cnn_forward(x.astype(jnp.bfloat16), H, W, weight, bias))
    np.testing.assert_allclose(np.asarray(out_bf.astype(jnp.float32)),
                               np.asarray(ref), rtol=5e-2, atol=5e-2)

    # W-padding path: W=7, C=32 -> WC=224 (not a multiple of 128), padded to 8
    H2, W2 = 8, 7
    x2 = jax.random.normal(kx, (B, H2 * W2, C), jnp.float32)
    out_pad = jax.block_until_ready(pos_cnn_forward(x2, H2, W2, weight, bias))
    np.testing.assert_allclose(np.asarray(out_pad),
                               np.asarray(ref_forward(x2, H2, W2, weight, bias)),
                               rtol=1e-5, atol=1e-5)

    # q_to_ab path (scatter/gather glue + same Pallas conv kernel, no residual)
    n_tok = 8
    qx = jax.random.normal(kx, (B, n_tok, C), jnp.float32)
    rows_np = np.arange(n_tok)
    cols_np = (np.arange(n_tok) * 3) % W
    q_to_ab = np.stack([rows_np * 10 - 110, cols_np * 10 - 110],
                       axis=1).astype(np.float32)
    out2 = jax.block_until_ready(
        pos_cnn_forward(qx, H, W, weight, bias, q_to_ab=q_to_ab, tile_h=8))
    ref2 = ref_forward_qab(qx, H, W, weight, bias, q_to_ab)
    np.testing.assert_allclose(np.asarray(out2), np.asarray(ref2),
                               rtol=1e-5, atol=1e-5)

    print("KERNEL_OK")
</pallas_src>

<mosaic_0001>
module attributes {stable_mosaic.version = 11 : i64} {
  func.func @_dwconv3x3_packed_kernel(%arg0: i32, %arg1: i32, %arg2: memref<1x8x256xf32, #tpu.memory_space<vmem>>, %arg3: memref<1x1x2x256xf32, #tpu.memory_space<vmem>>, %arg4: memref<9x256xf32, #tpu.memory_space<vmem>>, %arg5: memref<1x256xf32, #tpu.memory_space<vmem>>, %arg6: memref<1x8x256xf32, #tpu.memory_space<vmem>>) attributes {dimension_semantics = [#tpu.dimension_semantics<parallel>, #tpu.dimension_semantics<parallel>], iteration_bounds = array<i64: 2, 2>, scalar_prefetch = 0 : i64, scratch_operands = 0 : i64, tpu.core_type = #tpu.core_type<tc>, window_params = [{transform_indices = @transform_0, window_bounds = array<i64: 1, 8, 256>}, {transform_indices = @transform_1, window_bounds = array<i64: 1, 1, 2, 256>}, {pipeline_mode = #tpu.pipeline_mode<synchronous>, transform_indices = @transform_2, window_bounds = array<i64: 9, 256>}, {pipeline_mode = #tpu.pipeline_mode<synchronous>, transform_indices = @transform_3, window_bounds = array<i64: 1, 256>}, {transform_indices = @transform_4, window_bounds = array<i64: 1, 8, 256>}]} {
    %c0 = arith.constant 0 : index
    %c0_0 = arith.constant 0 : index
    %c0_1 = arith.constant 0 : index
    %0 = vector.load %arg2[%c0, %c0_0, %c0_1] : memref<1x8x256xf32, #tpu.memory_space<vmem>>, vector<1x8x256xf32>
    %1 = vector.shape_cast %0 : vector<1x8x256xf32> to vector<8x256xf32>
    %c0_2 = arith.constant 0 : index
    %c0_3 = arith.constant 0 : index
    %c0_4 = arith.constant 0 : index
    %c0_5 = arith.constant 0 : index
    %2 = vector.load %arg3[%c0_2, %c0_3, %c0_4, %c0_5] : memref<1x1x2x256xf32, #tpu.memory_space<vmem>>, vector<1x1x2x256xf32>
    %3 = vector.shape_cast %2 : vector<1x1x2x256xf32> to vector<2x256xf32>
    %c0_6 = arith.constant 0 : index
    %c0_7 = arith.constant 0 : index
    %4 = vector.load %arg4[%c0_6, %c0_7] : memref<9x256xf32, #tpu.memory_space<vmem>>, vector<9x256xf32>
    %c0_8 = arith.constant 0 : index
    %c0_9 = arith.constant 0 : index
    %5 = vector.load %arg5[%c0_8, %c0_9] : memref<1x256xf32, #tpu.memory_space<vmem>>, vector<1x256xf32>
    %6 = vector.extract_strided_slice %3 {offsets = [0, 0], sizes = [1, 256], strides = [1, 1]} : vector<2x256xf32> to vector<1x256xf32>
    %7 = vector.extract_strided_slice %3 {offsets = [1, 0], sizes = [1, 256], strides = [1, 1]} : vector<2x256xf32> to vector<1x256xf32>
    %8 = tpu.concatenate %6, %1, %7 in 0 : vector<1x256xf32>, vector<8x256xf32>, vector<1x256xf32> -> vector<10x256xf32>
    %c32_i32 = arith.constant 32 : i32
    %9 = tpu.dynamic_rotate %8 by %c32_i32 dim 1 : vector<10x256xf32>, i32 -> vector<10x256xf32>
    %c224_i32 = arith.constant 224 : i32
    %10 = tpu.dynamic_rotate %8 by %c224_i32 dim 1 : vector<10x256xf32>, i32 -> vector<10x256xf32>
    %11 = vector.extract_strided_slice %8 {offsets = [1, 0], sizes = [8, 256], strides = [1, 1]} : vector<10x256xf32> to vector<8x256xf32>
    %12 = vector.extract_strided_slice %4 {offsets = [4, 0], sizes = [1, 256], strides = [1, 1]} : vector<9x256xf32> to vector<1x256xf32>
    %13 = vector.broadcast %12 : vector<1x256xf32> to vector<8x256xf32>
    %14 = arith.mulf %11, %13 : vector<8x256xf32>
    %15 = vector.broadcast %5 : vector<1x256xf32> to vector<8x256xf32>
    %16 = arith.addf %14, %15 : vector<8x256xf32>
    %17 = vector.extract_strided_slice %9 {offsets = [0, 0], sizes = [8, 256], strides = [1, 1]} : vector<10x256xf32> to vector<8x256xf32>
    %18 = vector.extract_strided_slice %4 {offsets = [0, 0], sizes = [1, 256], strides = [1, 1]} : vector<9x256xf32> to vector<1x256xf32>
    %19 = vector.broadcast %18 : vector<1x256xf32> to vector<8x256xf32>
    %20 = arith.mulf %17, %19 : vector<8x256xf32>
    %21 = arith.addf %16, %20 : vector<8x256xf32>
    %22 = vector.extract_strided_slice %8 {offsets = [0, 0], sizes = [8, 256], strides = [1, 1]} : vector<10x256xf32> to vector<8x256xf32>
    %23 = vector.extract_strided_slice %4 {offsets = [1, 0], sizes = [1, 256], strides = [1, 1]} : vector<9x256xf32> to vector<1x256xf32>
    %24 = vector.broadcast %23 : vector<1x256xf32> to vector<8x256xf32>
    %25 = arith.mulf %22, %24 : vector<8x256xf32>
    %26 = arith.addf %21, %25 : vector<8x256xf32>
    %27 = vector.extract_strided_slice %10 {offsets = [0, 0], sizes = [8, 256], strides = [1, 1]} : vector<10x256xf32> to vector<8x256xf32>
    %28 = vector.extract_strided_slice %4 {offsets = [2, 0], sizes = [1, 256], strides = [1, 1]} : vector<9x256xf32> to vector<1x256xf32>
    %29 = vector.broadcast %28 : vector<1x256xf32> to vector<8x256xf32>
    %30 = arith.mulf %27, %29 : vector<8x256xf32>
    %31 = arith.addf %26, %30 : vector<8x256xf32>
    %32 = vector.extract_strided_slice %9 {offsets = [1, 0], sizes = [8, 256], strides = [1, 1]} : vector<10x256xf32> to vector<8x256xf32>
    %33 = vector.extract_strided_slice %4 {offsets = [3, 0], sizes = [1, 256], strides = [1, 1]} : vector<9x256xf32> to vector<1x256xf32>
    %34 = vector.broadcast %33 : vector<1x256xf32> to vector<8x256xf32>
    %35 = arith.mulf %32, %34 : vector<8x256xf32>
    %36 = arith.addf %31, %35 : vector<8x256xf32>
    %37 = vector.extract_strided_slice %10 {offsets = [1, 0], sizes = [8, 256], strides = [1, 1]} : vector<10x256xf32> to vector<8x256xf32>
    %38 = vector.extract_strided_slice %4 {offsets = [5, 0], sizes = [1, 256], strides = [1, 1]} : vector<9x256xf32> to vector<1x256xf32>
    %39 = vector.broadcast %38 : vector<1x256xf32> to vector<8x256xf32>
    %40 = arith.mulf %37, %39 : vector<8x256xf32>
    %41 = arith.addf %36, %40 : vector<8x256xf32>
    %42 = vector.extract_strided_slice %9 {offsets = [2, 0], sizes = [8, 256], strides = [1, 1]} : vector<10x256xf32> to vector<8x256xf32>
    %43 = vector.extract_strided_slice %4 {offsets = [6, 0], sizes = [1, 256], strides = [1, 1]} : vector<9x256xf32> to vector<1x256xf32>
    %44 = vector.broadcast %43 : vector<1x256xf32> to vector<8x256xf32>
    %45 = arith.mulf %42, %44 : vector<8x256xf32>
    %46 = arith.addf %41, %45 : vector<8x256xf32>
    %47 = vector.extract_strided_slice %8 {offsets = [2, 0], sizes = [8, 256], strides = [1, 1]} : vector<10x256xf32> to vector<8x256xf32>
    %48 = vector.extract_strided_slice %4 {offsets = [7, 0], sizes = [1, 256], strides = [1, 1]} : vector<9x256xf32> to vector<1x256xf32>
    %49 = vector.broadcast %48 : vector<1x256xf32> to vector<8x256xf32>
    %50 = arith.mulf %47, %49 : vector<8x256xf32>
    %51 = arith.addf %46, %50 : vector<8x256xf32>
    %52 = vector.extract_strided_slice %10 {offsets = [2, 0], sizes = [8, 256], strides = [1, 1]} : vector<10x256xf32> to vector<8x256xf32>
    %53 = vector.extract_strided_slice %4 {offsets = [8, 0], sizes = [1, 256], strides = [1, 1]} : vector<9x256xf32> to vector<1x256xf32>
    %54 = vector.broadcast %53 : vector<1x256xf32> to vector<8x256xf32>
    %55 = arith.mulf %52, %54 : vector<8x256xf32>
    %56 = arith.addf %51, %55 : vector<8x256xf32>
    %c0_10 = arith.constant 0 : index
    %c0_11 = arith.constant 0 : index
    %c0_12 = arith.constant 0 : index
    %57 = vector.load %arg6[%c0_10, %c0_11, %c0_12] : memref<1x8x256xf32, #tpu.memory_space<vmem>>, vector<1x8x256xf32>
    %58 = vector.shape_cast %57 : vector<1x8x256xf32> to vector<8x256xf32>
    %59 = vector.shape_cast %56 : vector<8x256xf32> to vector<1x8x256xf32>
    tpu.vector_store %arg6[%c0_10, %c0_11, %c0_12], %59 {strides = array<i32>} : memref<1x8x256xf32, #tpu.memory_space<vmem>>, vector<1x8x256xf32>,
    return
  }
  func.func @transform_0(%arg0: i32, %arg1: i32) -> (i32, i32, i32) {
    %c0_i32 = arith.constant 0 : i32
    %c0_i32_0 = arith.constant 0 : i32
    return %arg0, %arg1, %c0_i32 : i32, i32, i32
  }
  func.func @transform_1(%arg0: i32, %arg1: i32) -> (i32, i32, i32, i32) {
    %c0_i32 = arith.constant 0 : i32
    %c0_i32_0 = arith.constant 0 : i32
    %c0_i32_1 = arith.constant 0 : i32
    return %arg0, %arg1, %c0_i32, %c0_i32_0 : i32, i32, i32, i32
  }
  func.func @transform_2(%arg0: i32, %arg1: i32) -> (i32, i32) {
    %c0_i32 = arith.constant 0 : i32
    %c0_i32_0 = arith.constant 0 : i32
    %c0_i32_1 = arith.constant 0 : i32
    return %c0_i32, %c0_i32_0 : i32, i32
  }
  func.func @transform_3(%arg0: i32, %arg1: i32) -> (i32, i32) {
    %c0_i32 = arith.constant 0 : i32
    %c0_i32_0 = arith.constant 0 : i32
    %c0_i32_1 = arith.constant 0 : i32
    return %c0_i32, %c0_i32_0 : i32, i32
  }
  func.func @transform_4(%arg0: i32, %arg1: i32) -> (i32, i32, i32) {
    %c0_i32 = arith.constant 0 : i32
    %c0_i32_0 = arith.constant 0 : i32
    return %arg0, %arg1, %c0_i32 : i32, i32, i32
  }
}

</mosaic_0001>

<llo_original>
// kernel: tpu_custom_call.1
$region0: #{tpu_custom_call.1}
  #allocation0 [shape = 'u32[]', space=smem, size = 0x4, offset = 0x4, fixed_abs, tag = 'smem constant byte address 0x4 - core index']
  #allocation1 [shape = 'u32[144,128]{1,0:T(1,128)}', space=vmem, size = 0x12000, scoped, tag = 'internal scratch']
  %s0 = inlined_call_operand.hbm [shape: f32[2,16,256], index: 0, kind: input, shape index: {}]
  %s1 = inlined_call_operand.hbm [shape: f32[2,2,2,256], index: 1, kind: input, shape index: {}]
  %s2 = inlined_call_operand.hbm [shape: f32[9,256], index: 2, kind: input, shape index: {}]
  %s3 = inlined_call_operand.vmem [shape: f32[1,256], index: 3, kind: input, shape index: {}]
  %s4 = inlined_call_operand.hbm [shape: f32[2,16,256], index: 4, kind: output, shape index: {}]
  %s5 = sld [smem:[#allocation0]]
  $region61: #{tpu_custom_call.1} parent=0
    _
  %s7 = ssub.s32 1, %s5
  %s8 = scalar_select 0, %s7, %s5
  $region1: #{tpu_custom_call.1} parent=0
    #allocation2 [shape = 'u8[16384]{0}', space=vmem, size = 0x4000, scoped, tag = 'input window, operand 0']
    #allocation3 [shape = 's32[2]{0}', space=sflag, size = 0x8, scoped, tag = 'scoped memory for tpu_custom_call.1']
    #allocation4 [shape = 's32[2]{0}', space=sflag, size = 0x8, scoped, tag = 'scoped memory for tpu_custom_call.1']
    #allocation5 [shape = 'u8[4096]{0}', space=vmem, size = 0x1000, scoped, tag = 'input window, operand 1']
    #allocation6 [shape = 's32[2]{0}', space=sflag, size = 0x8, scoped, tag = 'scoped memory for tpu_custom_call.1']
    #allocation7 [shape = 'u8[16384]{0}', space=vmem, size = 0x4000, scoped, tag = 'input window, operand 2, single buffered']
    #allocation8 [shape = 'u8[16384]{0}', space=vmem, size = 0x4000, scoped, tag = 'output window, operand 0']
    %9 = vsyncpa [#allocation3], 0
    %s10 = scalar_lea.sflag [#allocation3], 1
    %11 = vsyncpa %s10, 0
    %12 = vsyncpa [#allocation6], 0
    %s13 = scalar_lea.sflag [#allocation6], 1
    %14 = vsyncpa %s13, 0
    %15 = vsyncpa [#allocation4], 0
    %s16 = scalar_lea.sflag [#allocation4], 1
    %17 = vsyncpa %s16, 0
    loop: start=0, step=1, limit=6
    $region2: #{tpu_custom_call.1} parent=1 // loop_pre_header
      _
    $region3: #{tpu_custom_call.1} parent=1 // loop_header
      %s19 = sphi 0, %s23
      %p20 = scmp.ge.s32.totalorder %s19, 6
      %s26 = sphi 0, %s38
      %s27 = sphi 0, %s34
      %s28 = sphi 0, %s26
      %s29 = sphi 0, %s27
      %s30 = sphi 0, %s28
      %s31 = sphi 0, %s29
      %s43 = sphi 0, %s45
      %s46 = sphi 0, %s43
      %s47 = sphi 0, %s46
      %s63 = sphi 0, %s47
      %s71 = sphi 0, %s73
      %s74 = sphi 0, %s71
      %s75 = sphi 0, %s74
      %s91 = sphi 0, %s75
      %s95 = sphi 0, %s95
      %s97 = sphi 0, %s95
      %s98 = sphi 0, %s97
      %s112 = sphi 0, %s98
      %s116 = sphi 0, %s116
      %s118 = sphi 0, %s116
      %s119 = sphi 0, %s118
      %s133 = sphi 0, %s119
      %s141 = sphi 0, %s143
      %s144 = sphi 0, %s141
      %s145 = sphi 0, %s144
      %s161 = sphi 0, %s145
    $region4: #{tpu_custom_call.1} parent=1 // loop_header_branch
      %22 = sbr.rel (%p20) target = $region8
    $region5: #{tpu_custom_call.1} parent=1 // loop_body
      %s24 = ssub.s32 %s19, 1
      %s25 = ssub.s32 %s19, 2
      %s32 = sadd.s32 1, %s27
      %p33 = scmp.ge.s32.totalorder %s32, 2
      %s34 = scalar_select %p33, 0, %s32
      %s35 = sadd.s32 1, %s26
      %s36 = scalar_select %p33, %s35, %s26
      %p37 = scmp.ge.s32.totalorder %s36, 2
      %s38 = scalar_select %p37, 0, %s36
      %s39 = ssub.s32 %s26, %s38
      %s40 = ssub.s32 %s27, %s34
      %s41 = sor.u32 %s39, %s40
      %p42 = scmp.eq.s32.totalorder %s41, 0
      %s44 = sadd.s32 %s43, 1
      %s45 = scalar_select %p42, %s43, %s44
      %p48 = pneg %p42
      %p49 = scmp.eq.s32.totalorder %s19, 3
      %p50 = por %p48, %p49
      %p51 = scmp.ne.s32.totalorder %s43, %s46
      %p52 = scmp.eq.s32.totalorder %s19, 0
      %p53 = por %p51, %p52
      %p54 = scmp.ne.s32.totalorder %s43, %s46
      %p55 = scmp.eq.s32.totalorder %s24, 3
      %p56 = por %p54, %p55
      %p57 = scmp.ne.s32.totalorder %s46, %s47
      %p58 = scmp.eq.s32.totalorder %s24, 0
      %p59 = por %p57, %p58
      %p60 = scmp.ne.s32.totalorder %s46, %s47
      %p61 = scmp.eq.s32.totalorder %s25, 3
      %p62 = por %p60, %p61
      %p64 = scmp.ne.s32.totalorder %s47, %s63
      %p65 = scmp.eq.s32.totalorder %s25, 0
      %p66 = por %p64, %p65
      %s67 = ssub.s32 %s26, %s38
      %s68 = ssub.s32 %s27, %s34
      %s69 = sor.u32 %s67, %s68
      %p70 = scmp.eq.s32.totalorder %s69, 0
      %s72 = sadd.s32 %s71, 1
      %s73 = scalar_select %p70, %s71, %s72
      %p76 = pneg %p70
      %p77 = scmp.eq.s32.totalorder %s19, 3
      %p78 = por %p76, %p77
      %p79 = scmp.ne.s32.totalorder %s71, %s74
      %p80 = scmp.eq.s32.totalorder %s19, 0
      %p81 = por %p79, %p80
      %p82 = scmp.ne.s32.totalorder %s71, %s74
      %p83 = scmp.eq.s32.totalorder %s24, 3
      %p84 = por %p82, %p83
      %p85 = scmp.ne.s32.totalorder %s74, %s75
      %p86 = scmp.eq.s32.totalorder %s24, 0
      %p87 = por %p85, %p86
      %p88 = scmp.ne.s32.totalorder %s74, %s75
      %p89 = scmp.eq.s32.totalorder %s25, 3
      %p90 = por %p88, %p89
      %p92 = scmp.ne.s32.totalorder %s75, %s91
      %p93 = scmp.eq.s32.totalorder %s25, 0
      %p94 = por %p92, %p93
      %s96 = sadd.s32 %s95, 1
      %p99 = scmp.eq.s32.totalorder %s19, 3
      %p100 = scmp.ne.s32.totalorder %s95, %s97
      %p101 = scmp.eq.s32.totalorder %s19, 0
      %p102 = por %p100, %p101
      %p103 = scmp.ne.s32.totalorder %s95, %s97
      %p104 = scmp.eq.s32.totalorder %s24, 3
      %p105 = por %p103, %p104
      %p106 = scmp.ne.s32.totalorder %s97, %s98
      %p107 = scmp.eq.s32.totalorder %s24, 0
      %p108 = por %p106, %p107
      %p109 = scmp.ne.s32.totalorder %s97, %s98
      %p110 = scmp.eq.s32.totalorder %s25, 3
      %p111 = por %p109, %p110
      %p113 = scmp.ne.s32.totalorder %s98, %s112
      %p114 = scmp.eq.s32.totalorder %s25, 0
      %p115 = por %p113, %p114
      %s117 = sadd.s32 %s116, 1
      %p120 = scmp.eq.s32.totalorder %s19, 3
      %p121 = scmp.ne.s32.totalorder %s116, %s118
      %p122 = scmp.eq.s32.totalorder %s19, 0
      %p123 = por %p121, %p122
      %p124 = scmp.ne.s32.totalorder %s116, %s118
      %p125 = scmp.eq.s32.totalorder %s24, 3
      %p126 = por %p124, %p125
      %p127 = scmp.ne.s32.totalorder %s118, %s119
      %p128 = scmp.eq.s32.totalorder %s24, 0
      %p129 = por %p127, %p128
      %p130 = scmp.ne.s32.totalorder %s118, %s119
      %p131 = scmp.eq.s32.totalorder %s25, 3
      %p132 = por %p130, %p131
      %p134 = scmp.ne.s32.totalorder %s119, %s133
      %p135 = scmp.eq.s32.totalorder %s25, 0
      %p136 = por %p134, %p135
      %s137 = ssub.s32 %s26, %s38
      %s138 = ssub.s32 %s27, %s34
      %s139 = sor.u32 %s137, %s138
      %p140 = scmp.eq.s32.totalorder %s139, 0
      %s142 = sadd.s32 %s141, 1
      %s143 = scalar_select %p140, %s141, %s142
      %p146 = pneg %p140
      %p147 = scmp.eq.s32.totalorder %s19, 3
      %p148 = por %p146, %p147
      %p149 = scmp.ne.s32.totalorder %s141, %s144
      %p150 = scmp.eq.s32.totalorder %s19, 0
      %p151 = por %p149, %p150
      %p152 = scmp.ne.s32.totalorder %s141, %s144
      %p153 = scmp.eq.s32.totalorder %s24, 3
      %p154 = por %p152, %p153
      %p155 = scmp.ne.s32.totalorder %s144, %s145
      %p156 = scmp.eq.s32.totalorder %s24, 0
      %p157 = por %p155, %p156
      %p158 = scmp.ne.s32.totalorder %s144, %s145
      %p159 = scmp.eq.s32.totalorder %s25, 3
      %p160 = por %p158, %p159
      %p162 = scmp.ne.s32.totalorder %s145, %s161
      %p163 = scmp.eq.s32.totalorder %s25, 0
      %p164 = por %p162, %p163
      %p165 = scmp.le.s32.totalorder 1, %s19
      %p166 = scmp.lt.s32.totalorder %s19, 5
      %p167 = pnand %p165, %p166
      %p168 = pneg %p167
      // Predicated region
      $region9: #{tpu_custom_call.1} parent=5 // pred_check
        _
      $region10: #{tpu_custom_call.1} parent=5 // pred_check_branch
        %170 = sbr.rel (%p167) target = $region12
      $region11: #{tpu_custom_call.1} parent=5 // pred_region
        %s171 = ssub.s32 %s19, 1
        // Predicated region
        $region13: #{tpu_custom_call.1} parent=11 // pred_check
          %p172 = pneg %p108
        $region14: #{tpu_custom_call.1} parent=11 // pred_check_branch
          %174 = sbr.rel (%p172) target = $region16
        $region15: #{tpu_custom_call.1} parent=11 // pred_region
          %s176 = ssub.s32 512, 512
          %177 = vsyncadd [#allocation6], %s176
          %s178 = sshll.u32 [#allocation7], 4
          %s179 = int_to_ptr.vmem [resolvable:$true] %s178
          %184 = dma.hbm_to_vmem [thread:$0]  %s2, 512, %s179, [#allocation6], 256, 256, 16
        $region16: #{tpu_custom_call.1} parent=11 // pred_fallthru
          _
        // Predicated region
        $region17: #{tpu_custom_call.1} parent=11 // pred_check
          %p185 = pneg %p129
        $region18: #{tpu_custom_call.1} parent=11 // pred_check_branch
          %187 = sbr.rel (%p185) target = $region20
        $region19: #{tpu_custom_call.1} parent=11 // pred_region
          _
        $region20: #{tpu_custom_call.1} parent=11 // pred_fallthru
          _
      $region12: #{tpu_custom_call.1} parent=5 // pred_fallthru
        _
      %p188 = scmp.lt.s32.totalorder %s19, 4
      // Predicated region
      $region21: #{tpu_custom_call.1} parent=5 // pred_check
        %p189 = pneg %p188
      $region22: #{tpu_custom_call.1} parent=5 // pred_check_branch
        %191 = sbr.rel (%p189) target = $region24
      $region23: #{tpu_custom_call.1} parent=5 // pred_region
        // Predicated region
        $region25: #{tpu_custom_call.1} parent=23 // pred_check
          %p192 = pneg %p53
        $region26: #{tpu_custom_call.1} parent=23 // pred_check_branch
          %194 = sbr.rel (%p192) target = $region28
        $region27: #{tpu_custom_call.1} parent=23 // pred_region
          %s195 = sand.u32 %s43, 1
          %s196 = scalar_lea.sflag [#allocation3], %s195
          %s197 = sand.u32 %s43, 1
          %s198 = smul.addr %s197, 16
          %s199 = scalar_lea.vmem [#allocation2], %s198
          %s201 = ssub.s32 256, 256
          %202 = vsyncadd %s196, %s201
          %s203 = smul.addr %s27, 2
          %s204 = smul.addr %s26, 4
          %s205 = sadd.s32 %s203, %s204
          %s206 = smul.addr %s205, 128
          %s207 = scalar_lea.hbm %s0, %s206
          %s209 = sshll.u32 %s199, 4
          %s210 = int_to_ptr.vmem [resolvable:$true] %s209
          %212 = dma.hbm_to_vmem [thread:$0]  %s207, 256, %s210, %s196
        $region28: #{tpu_custom_call.1} parent=23 // pred_fallthru
          _
        // Predicated region
        $region29: #{tpu_custom_call.1} parent=23 // pred_check
          %p213 = pneg %p81
        $region30: #{tpu_custom_call.1} parent=23 // pred_check_branch
          %215 = sbr.rel (%p213) target = $region32
        $region31: #{tpu_custom_call.1} parent=23 // pred_region
          %s216 = sand.u32 %s19, 1
          %s217 = scalar_lea.sflag [#allocation6], %s216
          %s218 = sand.u32 %s71, 1
          %s219 = smul.addr %s218, 4
          %s220 = scalar_lea.vmem [#allocation5], %s219
          %s222 = ssub.s32 64, 64
          %223 = vsyncadd %s217, %s222
          %s224 = smul.addr %s27, 2
          %s225 = smul.addr %s26, 4
          %s226 = sadd.s32 %s224, %s225
          %s227 = smul.addr %s226, 32
          %s228 = scalar_lea.hbm %s1, %s227
          %s230 = sshll.u32 %s220, 4
          %s231 = int_to_ptr.vmem [resolvable:$true] %s230
          %233 = dma.hbm_to_vmem [thread:$0]  %s228, 64, %s231, %s217
        $region32: #{tpu_custom_call.1} parent=23 // pred_fallthru
          _
      $region24: #{tpu_custom_call.1} parent=5 // pred_fallthru
        _
      %p234 = scmp.le.s32.totalorder 1, %s19
      %p235 = scmp.lt.s32.totalorder %s19, 5
      %p236 = pnand %p234, %p235
      %p237 = pneg %p236
      // Predicated region
      $region33: #{tpu_custom_call.1} parent=5 // pred_check
        _
      $region34: #{tpu_custom_call.1} parent=5 // pred_check_branch
        %239 = sbr.rel (%p236) target = $region36
      $region35: #{tpu_custom_call.1} parent=5 // pred_region
        %s240 = ssub.s32 %s19, 1
        %s241 = sand.u32 %s46, 1
        %s242 = scalar_lea.sflag [#allocation3], %s241
        %s243 = sand.u32 %s46, 1
        %s244 = smul.addr %s243, 16
        %s245 = scalar_lea.vmem [#allocation2], %s244
        // Predicated region
        $region37: #{tpu_custom_call.1} parent=35 // pred_check
          %p246 = pneg %p59
        $region38: #{tpu_custom_call.1} parent=35 // pred_check_branch
          %248 = sbr.rel (%p246) target = $region40
        $region39: #{tpu_custom_call.1} parent=35 // pred_region
          %249 = dma.done %s242, 256
        $region40: #{tpu_custom_call.1} parent=35 // pred_fallthru
          _
        %s250 = sand.u32 %s24, 1
        %s251 = scalar_lea.sflag [#allocation6], %s250
        %s252 = sand.u32 %s74, 1
        %s253 = smul.addr %s252, 4
        %s254 = scalar_lea.vmem [#allocation5], %s253
        // Predicated region
        $region41: #{tpu_custom_call.1} parent=35 // pred_check
          %p255 = pneg %p87
        $region42: #{tpu_custom_call.1} parent=35 // pred_check_branch
          %257 = sbr.rel (%p255) target = $region44
        $region43: #{tpu_custom_call.1} parent=35 // pred_region
          %258 = dma.done %s251, 64
        $region44: #{tpu_custom_call.1} parent=35 // pred_fallthru
          _
        // Predicated region
        $region45: #{tpu_custom_call.1} parent=35 // pred_check
          %p259 = pneg %p108
        $region46: #{tpu_custom_call.1} parent=35 // pred_check_branch
          %261 = sbr.rel (%p259) target = $region48
        $region47: #{tpu_custom_call.1} parent=35 // pred_region
          %262 = dma.done [#allocation6], 512
        $region48: #{tpu_custom_call.1} parent=35 // pred_fallthru
          _
        %s263 = sand.u32 %s46, 1
        %s264 = scalar_lea.sflag [#allocation3], %s263
        %s265 = sand.u32 %s46, 1
        %s266 = smul.addr %s265, 16
        %s267 = scalar_lea.vmem [#allocation2], %s266
        %p268 = pneg %p59
        %p269 = pneg %p56
        %s270 = sand.u32 %s24, 1
        %s271 = scalar_lea.sflag [#allocation6], %s270
        %s272 = sand.u32 %s74, 1
        %s273 = smul.addr %s272, 4
        %s274 = scalar_lea.vmem [#allocation5], %s273
        %p275 = pneg %p87
        %p276 = pneg %p84
        %p277 = pneg %p108
        %p278 = pneg %p105
        %p279 = pneg %p129
        %p280 = pneg %p126
        %p281 = pneg %p157
        %p282 = pneg %p154
        %s283 = sand.u32 %s144, 1
        %s284 = scalar_lea.sflag [#allocation4], %s283
        %s285 = sand.u32 %s144, 1
        %s286 = smul.addr %s285, 16
        %s287 = scalar_lea.vmem [#allocation8], %s286
        %v288 = vld [vmem:[%s245] sm:$0xff]
        %v289 = vld [vmem:[%s245 + $0x8] sm:$0xff]
        %v290 = vld [vmem:[%s254] sm:$0xf]
        %v291 = vld [vmem:[#allocation7] sm:$0xff]
        %v292 = vld [vmem:[#allocation7 + $0x8] sm:$0xff]
        %v293 = vld [vmem:[#allocation7 + $0x10] sm:$0x1]
        %v294 = vld [vmem:[#allocation7 + $0x18] sm:$0x1]
        %v295 = vld [vmem:[%s3] sm:$0x3]
        %v297 = vlaneseq
        %v298 = vshrl.u32 %v297, 7
        %v299 = vsub.s32 0, %v298
        %v300 = vrot.slane %v290, %v299
        %v301 = vlaneseq
        %v302 = vshrl.u32 %v301, 7
        %v303 = vsub.s32 2, %v302
        %v304 = vrot.slane %v290, %v303
        %v309 = vrot.slane %v288, 7
        %v310 = vrot.slane %v289, 7
        %v313 = vlaneseq
        %v314 = vshrl.u32 %v313, 7
        %v315 = vsub.s32 1, %v314
        %v316 = vrot.slane %v290, %v315
        %v317 = vlaneseq
        %v318 = vshrl.u32 %v317, 7
        %v319 = vsub.s32 3, %v318
        %v320 = vrot.slane %v290, %v319
        %vm323 = vcmask 1040384
        %v324 = vsel %vm323, %v300, %v309
        %v325 = vsel %vm323, %v304, %v310
        %v326 = vsel %vm323, %v309, %v316
        %v327 = vsel %vm323, %v310, %v320
        %328 = vrot.lane.b32.xlu0 %v324, 32
        %v329 = vpop.permute.xlu0 %328
        %330 = vrot.lane.b32.xlu0 %v326, 32
        %v331 = vpop.permute.xlu0 %330
        %332 = vrot.lane.b32.xlu0 %v325, 32
        %v333 = vpop.permute.xlu0 %332
        %334 = vrot.lane.b32.xlu0 %v327, 32
        %v335 = vpop.permute.xlu0 %334
        %v336 = vlaneseq
        %v337 = vand.u32 %v336, 127
        %vm338 = vcmp.lt.s32.totalorder %v337, 32
        %v339 = vsel %vm338, %v329, %v333
        %v340 = vsel %vm338, %v331, %v335
        %v341 = vsel %vm338, %v333, %v329
        %v342 = vsel %vm338, %v335, %v331
        %343 = vrot.lane.b32.xlu0 %v324, 96
        %v344 = vpop.permute.xlu0 %343
        %345 = vrot.lane.b32.xlu0 %v326, 96
        %v346 = vpop.permute.xlu0 %345
        %347 = vrot.lane.b32.xlu0 %v325, 96
        %v348 = vpop.permute.xlu0 %347
        %349 = vrot.lane.b32.xlu0 %v327, 96
        %v350 = vpop.permute.xlu0 %349
        %vm351 = vcmp.lt.s32.totalorder %v337, 96
        %v352 = vsel %vm351, %v344, %v348
        %v353 = vsel %vm351, %v346, %v350
        %v354 = vsel %vm351, %v348, %v344
        %v355 = vsel %vm351, %v350, %v346
        %v356 = vlaneseq
        %v357 = vshrl.u32 %v356, 7
        %v358 = vsub.s32 4, %v357
        %v359 = vrot.slane %v291, %v358
        %v360 = vlaneseq
        %v361 = vshrl.u32 %v360, 7
        %v362 = vsub.s32 4, %v361
        %v363 = vrot.slane %v292, %v362
        %v364 = vmul.f32 %v324, %v359
        %v365 = vmul.f32 %v325, %v363
        %v366 = vmul.f32 %v326, %v359
        %v367 = vmul.f32 %v327, %v363
        %v369 = vlaneseq
        %v370 = vshrl.u32 %v369, 7
        %v371 = vsub.s32 0, %v370
        %v372 = vrot.slane %v295, %v371
        %v373 = vlaneseq
        %v374 = vshrl.u32 %v373, 7
        %v375 = vsub.s32 1, %v374
        %v376 = vrot.slane %v295, %v375
        %v379 = vadd.f32 %v364, %v372
        %v380 = vadd.f32 %v365, %v376
        %v381 = vadd.f32 %v366, %v372
        %v382 = vadd.f32 %v367, %v376
        %v383 = vlaneseq
        %v384 = vshrl.u32 %v383, 7
        %v385 = vsub.s32 0, %v384
        %v386 = vrot.slane %v291, %v385
        %v387 = vlaneseq
        %v388 = vshrl.u32 %v387, 7
        %v389 = vsub.s32 0, %v388
        %v390 = vrot.slane %v292, %v389
        %v391 = vmul.f32 %v341, %v386
        %v392 = vmul.f32 %v339, %v390
        %v395 = vrot.slane %v391, 7
        %v396 = vrot.slane %v392, 7
        %v399 = vadd.f32 %v379, %v395
        %v400 = vadd.f32 %v380, %v396
        %v401 = vadd.f32 %v381, %v395
        %v402 = vadd.f32 %v382, %v396
        %v403 = vlaneseq
        %v404 = vshrl.u32 %v403, 7
        %v405 = vsub.s32 1, %v404
        %v406 = vrot.slane %v291, %v405
        %v407 = vlaneseq
        %v408 = vshrl.u32 %v407, 7
        %v409 = vsub.s32 1, %v408
        %v410 = vrot.slane %v292, %v409
        %v411 = vmul.f32 %v324, %v406
        %v412 = vmul.f32 %v325, %v410
        %v415 = vrot.slane %v411, 7
        %v416 = vrot.slane %v412, 7
        %v419 = vadd.f32 %v399, %v415
        %v420 = vadd.f32 %v400, %v416
        %v421 = vadd.f32 %v401, %v415
        %v422 = vadd.f32 %v402, %v416
        %v423 = vlaneseq
        %v424 = vshrl.u32 %v423, 7
        %v425 = vsub.s32 2, %v424
        %v426 = vrot.slane %v291, %v425
        %v427 = vlaneseq
        %v428 = vshrl.u32 %v427, 7
        %v429 = vsub.s32 2, %v428
        %v430 = vrot.slane %v292, %v429
        %v431 = vmul.f32 %v352, %v426
        %v432 = vmul.f32 %v354, %v430
        %v435 = vrot.slane %v431, 7
        %v436 = vrot.slane %v432, 7
        %v439 = vadd.f32 %v419, %v435
        %v440 = vadd.f32 %v420, %v436
        %v441 = vadd.f32 %v421, %v435
        %v442 = vadd.f32 %v422, %v436
        %v443 = vlaneseq
        %v444 = vshrl.u32 %v443, 7
        %v445 = vsub.s32 3, %v444
        %v446 = vrot.slane %v291, %v445
        %v447 = vlaneseq
        %v448 = vshrl.u32 %v447, 7
        %v449 = vsub.s32 3, %v448
        %v450 = vrot.slane %v292, %v449
        %v451 = vmul.f32 %v341, %v446
        %v452 = vmul.f32 %v339, %v450
        %v453 = vmul.f32 %v342, %v446
        %v454 = vmul.f32 %v340, %v450
        %v455 = vadd.f32 %v439, %v451
        %v456 = vadd.f32 %v440, %v452
        %v457 = vadd.f32 %v441, %v453
        %v458 = vadd.f32 %v442, %v454
        %v459 = vlaneseq
        %v460 = vshrl.u32 %v459, 7
        %v461 = vsub.s32 5, %v460
        %v462 = vrot.slane %v291, %v461
        %v463 = vlaneseq
        %v464 = vshrl.u32 %v463, 7
        %v465 = vsub.s32 5, %v464
        %v466 = vrot.slane %v292, %v465
        %v467 = vmul.f32 %v352, %v462
        %v468 = vmul.f32 %v354, %v466
        %v469 = vmul.f32 %v353, %v462
        %v470 = vmul.f32 %v355, %v466
        %v471 = vadd.f32 %v455, %v467
        %v472 = vadd.f32 %v456, %v468
        %v473 = vadd.f32 %v457, %v469
        %v474 = vadd.f32 %v458, %v470
        %v475 = vlaneseq
        %v476 = vshrl.u32 %v475, 7
        %v477 = vsub.s32 6, %v476
        %v478 = vrot.slane %v291, %v477
        %v479 = vlaneseq
        %v480 = vshrl.u32 %v479, 7
        %v481 = vsub.s32 6, %v480
        %v482 = vrot.slane %v292, %v481
        %v483 = vmul.f32 %v341, %v478
        %v484 = vmul.f32 %v339, %v482
        %v485 = vmul.f32 %v342, %v478
        %v486 = vmul.f32 %v340, %v482
        %vm491 = vcmask 1046528
        %v492 = vrot.slane %v483, 1
        %v493 = vrot.slane %v485, 1
        %v494 = vsel %vm491, %v492, %v493
        %v495 = vrot.slane %v484, 1
        %v496 = vrot.slane %v486, 1
        %v497 = vsel %vm491, %v495, %v496
        %v502 = vadd.f32 %v471, %v494
        %v503 = vadd.f32 %v472, %v497
        %v504 = vadd.f32 %v473, %v493
        %v505 = vadd.f32 %v474, %v496
        %v506 = vlaneseq
        %v507 = vshrl.u32 %v506, 7
        %v508 = vsub.s32 7, %v507
        %v509 = vrot.slane %v291, %v508
        %v510 = vlaneseq
        %v511 = vshrl.u32 %v510, 7
        %v512 = vsub.s32 7, %v511
        %v513 = vrot.slane %v292, %v512
        %v514 = vmul.f32 %v324, %v509
        %v515 = vmul.f32 %v325, %v513
        %v516 = vmul.f32 %v326, %v509
        %v517 = vmul.f32 %v327, %v513
        %v522 = vrot.slane %v514, 1
        %v523 = vrot.slane %v516, 1
        %v524 = vsel %vm491, %v522, %v523
        %v525 = vrot.slane %v515, 1
        %v526 = vrot.slane %v517, 1
        %v527 = vsel %vm491, %v525, %v526
        %v532 = vadd.f32 %v502, %v524
        %v533 = vadd.f32 %v503, %v527
        %v534 = vadd.f32 %v504, %v523
        %v535 = vadd.f32 %v505, %v526
        %v536 = vlaneseq
        %v537 = vshrl.u32 %v536, 7
        %v538 = vsub.s32 0, %v537
        %v539 = vrot.slane %v293, %v538
        %v540 = vlaneseq
        %v541 = vshrl.u32 %v540, 7
        %v542 = vsub.s32 0, %v541
        %v543 = vrot.slane %v294, %v542
        %v544 = vmul.f32 %v352, %v539
        %v545 = vmul.f32 %v354, %v543
        %v546 = vmul.f32 %v353, %v539
        %v547 = vmul.f32 %v355, %v543
        %v552 = vrot.slane %v544, 1
        %v553 = vrot.slane %v546, 1
        %v554 = vsel %vm491, %v552, %v553
        %v555 = vrot.slane %v545, 1
        %v556 = vrot.slane %v547, 1
        %v557 = vsel %vm491, %v555, %v556
        %v562 = vadd.f32 %v532, %v554
        %v563 = vadd.f32 %v533, %v557
        %v564 = vadd.f32 %v534, %v553
        %v565 = vadd.f32 %v535, %v556
        %v570 = vrot.slane %v562, 1
        %v571 = vrot.slane %v564, 1
        %v572 = vsel %vm491, %v570, %v571
        %v573 = vrot.slane %v563, 1
        %v574 = vrot.slane %v565, 1
        %v575 = vsel %vm491, %v573, %v574
        %578 = vst [vmem:[%s287] sm:$0xff] %v572
        %579 = vst [vmem:[%s287 + $0x8] sm:$0xff] %v575
        %s580 = sand.u32 %s144, 1
        %s581 = scalar_lea.sflag [#allocation4], %s580
        %s582 = sand.u32 %s144, 1
        %s583 = smul.addr %s582, 16
        %s584 = scalar_lea.vmem [#allocation8], %s583
        // Predicated region
        $region49: #{tpu_custom_call.1} parent=35 // pred_check
          %p585 = pneg %p154
        $region50: #{tpu_custom_call.1} parent=35 // pred_check_branch
          %587 = sbr.rel (%p585) target = $region52
        $region51: #{tpu_custom_call.1} parent=35 // pred_region
          %s589 = ssub.s32 256, 256
          %590 = vsyncadd %s581, %s589
          %s591 = smul.addr %s29, 2
          %s592 = smul.addr %s28, 4
          %s593 = sadd.s32 %s591, %s592
          %s594 = smul.addr %s593, 128
          %s595 = scalar_lea.hbm %s4, %s594
          %s597 = sshll.u32 %s584, 4
          %s598 = int_to_ptr.vmem [resolvable:$true] %s597
          %600 = dma.vmem_to_hbm [thread:$0]  %s598, 256, %s595, %s581
        $region52: #{tpu_custom_call.1} parent=35 // pred_fallthru
          _
      $region36: #{tpu_custom_call.1} parent=5 // pred_fallthru
        _
      %p601 = scmp.le.s32.totalorder 2, %s19
      // Predicated region
      $region53: #{tpu_custom_call.1} parent=5 // pred_check
        %p602 = pneg %p601
      $region54: #{tpu_custom_call.1} parent=5 // pred_check_branch
        %604 = sbr.rel (%p602) target = $region56
      $region55: #{tpu_custom_call.1} parent=5 // pred_region
        %s605 = ssub.s32 %s19, 2
        // Predicated region
        $region57: #{tpu_custom_call.1} parent=55 // pred_check
          %p606 = pneg %p160
        $region58: #{tpu_custom_call.1} parent=55 // pred_check_branch
          %608 = sbr.rel (%p606) target = $region60
        $region59: #{tpu_custom_call.1} parent=55 // pred_region
          %s609 = sand.u32 %s145, 1
          %s610 = scalar_lea.sflag [#allocation4], %s609
          %s611 = sand.u32 %s145, 1
          %s612 = smul.addr %s611, 16
          %s613 = scalar_lea.vmem [#allocation8], %s612
          %614 = dma.done %s610, 256
        $region60: #{tpu_custom_call.1} parent=55 // pred_fallthru
          _
      $region56: #{tpu_custom_call.1} parent=5 // pred_fallthru
        _
    $region6: #{tpu_custom_call.1} parent=1 // loop_footer
      %s23 = sadd.s32 1, %s19
    $region7: #{tpu_custom_call.1} parent=1 // loop_footer_branch
      %18 = sbr.rel target = $region3
    $region8: #{tpu_custom_call.1} parent=1 // loop_exit
      _
    %615 = vsyncpa [#allocation3], 1
    %s616 = scalar_lea.sflag [#allocation3], 1
    %617 = vsyncpa %s616, 1
    %618 = vsyncpa [#allocation6], 1
    %s619 = scalar_lea.sflag [#allocation6], 1
    %620 = vsyncpa %s619, 1
    %621 = vsyncpa [#allocation4], 1
    %s622 = scalar_lea.sflag [#allocation4], 1
    %623 = vsyncpa %s622, 1

</llo_original>
